<compile_context>
chip_gen: v5e
topology: v5e:2x2
jax: 0.10.0
libtpu: 0.0.40
codegen_flags: <defaults>
</compile_context>

<pallas_src>
import jax
import jax.numpy as jnp
import numpy as np
from jax.experimental import pallas as pl
from jax.experimental.pallas import tpu as pltpu


GATE_PAD = 128   # per-gate lane slot == vreg lane width (also the padded hidden width)


# ----------------------------------------------------------------------------
# Fused kernel: sequential GRU recurrence (input projections precomputed,
# packed + lane-padded) + siamese |h1 - h2| MLP head.  Single invocation.
# ----------------------------------------------------------------------------
def gru_head_kernel(gi_ref,        # (T, 2B, 3*GP) f32   packed x-projections (+ folded r/z/n input biases)
                    w_h_ref,       # (HP, 3*GP)   bf16   fused recurrent weight [W_hr | W_hz | W_hn], padded
                    b_hn_ref,      # (1, HP)      f32
                    w1_ref,        # (HP, 32)     f32    head Linear(H, 32) (rows H..HP are zero)
                    b1_ref,        # (1, 32)      f32
                    w2_ref,        # (1, 32)      f32    head Linear(32, 1) as a row vector
                    b2_ref,        # (1, 1)       f32
                    out_ref):      # (B, 1)       f32
    T, Bp, GN = gi_ref.shape
    GP = GN // 3                   # 128: per-gate lane slot
    HP = w_h_ref.shape[0]          # 128: padded hidden width
    B = Bp // 2

    # Hoist all loop-invariant loads / broadcasts off the serial recurrence.
    w_h = w_h_ref[...]                                          # bf16 (HP, 3*GP)
    b_hn = jnp.broadcast_to(b_hn_ref[...], (Bp, HP))            # hoisted: no per-iteration broadcast_in_dim

    def step(t, h):
        g = gi_ref[t]                                           # (2B, 3*GP) — ONE slab load per step
        # ONE fused recurrent matmul (bf16 operands, f32 accumulation).
        hp = jnp.dot(h.astype(jnp.bfloat16), w_h,
                     preferred_element_type=jnp.float32)        # (2B, 3*GP)
        # Lane-aligned 128-wide slices at offsets 0 / 128 / 256.
        r = jax.nn.sigmoid(g[:, 0:GP]          + hp[:, 0:GP])
        z = jax.nn.sigmoid(g[:, GP:2 * GP]     + hp[:, GP:2 * GP])
        n = jnp.tanh(g[:, 2 * GP:3 * GP] + r * (hp[:, 2 * GP:3 * GP] + b_hn))
        return n + z * (h - n)                                  # == (1 - z) * n + z * h
        # Padded lanes stay 0: g,hp,b_hn are 0 there -> n=0, z=0.5 -> h_new=0.

    h0 = jnp.zeros((Bp, HP), jnp.float32)
    # Guarded unroll: full unroll for short T, bounded if T ever grows (vregs).
    h = jax.lax.fori_loop(0, T, step, h0, unroll=True if T <= 16 else 8)

    # Fused siamese head: |h1 - h2| -> Linear(H, 32) -> ReLU -> Linear(32, 1) -> Sigmoid.
    diff = jnp.abs(h[:B, :] - h[B:, :])                                       # (B, HP), padded lanes are 0
    z1 = jnp.dot(diff, w1_ref[...], preferred_element_type=jnp.float32) + b1_ref[...]
    z1 = jnp.maximum(z1, 0.0)                                                 # ReLU
    z2 = jnp.sum(z1 * w2_ref[...], axis=-1, keepdims=True) + b2_ref[...]      # reduction: no N=1 MXU pop
    out_ref[...] = jax.nn.sigmoid(z2)                                         # (B, 1)


# ----------------------------------------------------------------------------
# Wrapper: both siamese branches stacked along batch (2B) so one kernel call
# handles x1 and x2.  The batched input projection runs as a single fused XLA
# GEMM (off the latency-critical recurrence), emitted time-major and packed
# per-gate into 128-lane slots so the kernel reads ONE lane-aligned slab/step.
# ----------------------------------------------------------------------------
@jax.jit
def keypress_gru_forward(x1, x2, kp):
    """x1, x2: (B, T, D) batch_first float32. Returns (B, 1) in [0, 1]."""
    if x1.shape != x2.shape:
        raise ValueError("x1 and x2 must have identical (B, T, D) shapes")
    B, T, D = x1.shape
    x = jnp.concatenate([x1, x2], axis=0)                       # (2B, T, D), batch-first

    # Packed input projection: b_ih (and the folded b_hh for r/z) already included.
    # TODO(synk): at production T*B, fold this projection into the kernel itself
    # (one (2B*T, D)@(D, 3*128) matmul before the loop) to drop the gi HBM
    # materialization; at these sizes it is a single tiny fused XLA GEMM.
    gi = jnp.einsum("btd,dh->tbh", x, kp["w_i_packed"]) + kp["b_i_packed"]    # (T, 2B, 3*128) f32

    vmem = pl.BlockSpec(memory_space=pltpu.MemorySpace.VMEM)
    return pl.pallas_call(
        gru_head_kernel,
        out_shape=jax.ShapeDtypeStruct((B, 1), jnp.float32),
        in_specs=[vmem] * 7,
        out_specs=vmem,
        compiler_params=pltpu.CompilerParams(vmem_limit_bytes=32 * 1024 * 1024),
    )(gi, kp["w_h_packed"], kp["b_hn_pad"],
      kp["w1_pad"], kp["b1"], kp["w2_row"], kp["b2"])


# ----------------------------------------------------------------------------
# Parameter init (PyTorch default-style uniform bounds, torch gate order r,z,n)
# and packing into the fused, lane-padded kernel layout.
# ----------------------------------------------------------------------------
def init_params(key, input_dim=3, hidden_dim=64):
    H, D = hidden_dim, input_dim
    ks = jax.random.split(key, 16)
    kb = 1.0 / np.sqrt(H)
    kb2 = 1.0 / np.sqrt(32)
    u = lambda k, shape, b: jax.random.uniform(k, shape, jnp.float32, -b, b)
    return {
        # GRU (gate order r, z, n), gate-major, pre-transposed to (in, out)
        "w_ir_T": u(ks[0], (D, H), kb), "w_iz_T": u(ks[1], (D, H), kb), "w_in_T": u(ks[2], (D, H), kb),
        "w_hr_T": u(ks[3], (H, H), kb), "w_hz_T": u(ks[4], (H, H), kb), "w_hn_T": u(ks[5], (H, H), kb),
        "b_ir": u(ks[6], (1, H), kb), "b_iz": u(ks[7], (1, H), kb), "b_in": u(ks[8], (1, H), kb),
        "b_hr": u(ks[9], (1, H), kb), "b_hz": u(ks[10], (1, H), kb), "b_hn": u(ks[11], (1, H), kb),
        # fc head: Linear(H, 32) -> ReLU -> Linear(32, 1) -> Sigmoid
        "w1_T": u(ks[12], (H, 32), kb), "b1": u(ks[13], (1, 32), kb),
        "w2_T": u(ks[14], (32, 1), kb2), "b2": u(ks[15], (1, 1), kb2),
    }


def pack_params(p, gate_pad=GATE_PAD):
    """Fused, lane-padded kernel layout:
       - each gate gets its own 128-lane slot (result slices at lane 0/128/256);
       - hidden dim padded to 128 lanes (padded lanes stay exactly 0);
       - r/z biases pre-folded (b_ih + b_hh); b_hn stays separate (lives inside r*(...));
       - recurrent weight cast to bf16 (MXU operands; f32 accumulation in-kernel)."""
    D, H = p["w_ir_T"].shape
    GP = gate_pad
    HP = gate_pad

    def pad_cols(w, width=GP):
        return jnp.pad(w, ((0, 0), (0, width - w.shape[1])))

    def pad_hh(w):
        return jnp.pad(w, ((0, HP - H), (0, GP - H)))

    w_i_packed = jnp.concatenate(
        [pad_cols(p["w_ir_T"]), pad_cols(p["w_iz_T"]), pad_cols(p["w_in_T"])], axis=1)       # (D, 3*GP)
    b_i_packed = jnp.concatenate(
        [pad_cols(p["b_ir"] + p["b_hr"]), pad_cols(p["b_iz"] + p["b_hz"]), pad_cols(p["b_in"])],
        axis=1)                                                                               # (1, 3*GP)
    w_h_packed = jnp.concatenate(
        [pad_hh(p["w_hr_T"]), pad_hh(p["w_hz_T"]), pad_hh(p["w_hn_T"])], axis=1
    ).astype(jnp.bfloat16)                                                                    # (HP, 3*GP) bf16

    return {
        "w_i_packed": w_i_packed,
        "b_i_packed": b_i_packed,
        "w_h_packed": w_h_packed,
        "b_hn_pad": pad_cols(p["b_hn"], HP),                                                  # (1, HP)
        "w1_pad": jnp.pad(p["w1_T"], ((0, HP - H), (0, 0))),                                  # (HP, 32)
        "b1": p["b1"],                                                                        # (1, 32)
        "w2_row": p["w2_T"].T,                                                                # (1, 32)
        "b2": p["b2"],                                                                        # (1, 1)
    }


# ----------------------------------------------------------------------------
# Pure-JAX f32 reference (same math as torch.nn.GRU + fc head) for validation.
# ----------------------------------------------------------------------------
def reference_forward(x1, x2, p):
    def gru(x):
        B, T, D = x.shape
        H = p["w_hr_T"].shape[0]
        h = jnp.zeros((B, H), jnp.float32)
        for t in range(T):
            xt = x[:, t]
            r = jax.nn.sigmoid(xt @ p["w_ir_T"] + p["b_ir"] + h @ p["w_hr_T"] + p["b_hr"])
            z = jax.nn.sigmoid(xt @ p["w_iz_T"] + p["b_iz"] + h @ p["w_hz_T"] + p["b_hz"])
            n = jnp.tanh(xt @ p["w_in_T"] + p["b_in"] + r * (h @ p["w_hn_T"] + p["b_hn"]))
            h = (1.0 - z) * n + z * h
        return h

    diff = jnp.abs(gru(x1) - gru(x2))
    z1 = jnp.maximum(diff @ p["w1_T"] + p["b1"], 0.0)
    return jax.nn.sigmoid(z1 @ p["w2_T"] + p["b2"])


if __name__ == "__main__":
    B, T, D, H = 2, 8, 3, 64  # input_dim=3, hidden_dim=64 per module defaults

    root = jax.random.PRNGKey(0)
    k_param, kx1, kx2 = jax.random.split(root, 3)
    raw_params = init_params(k_param, input_dim=D, hidden_dim=H)
    kernel_params = pack_params(raw_params)

    x1 = jax.random.normal(kx1, (B, T, D), jnp.float32)
    x2 = jax.random.normal(kx2, (B, T, D), jnp.float32)

    out = keypress_gru_forward(x1, x2, kernel_params)
    out = jax.block_until_ready(out)
    assert out.shape == (B, 1)

    ref = reference_forward(x1, x2, raw_params)
    # bf16 MXU operands (f32 accumulation) in the kernel => loosened tolerance
    # vs. the all-f32 reference.
    np.testing.assert_allclose(np.asarray(out), np.asarray(ref), atol=2e-2, rtol=2e-2)

    print("KERNEL_OK")
</pallas_src>

<mosaic_0001>
module attributes {stable_mosaic.version = 11 : i64} {
  func.func @gru_head_kernel(%arg0: memref<8x4x384xf32, #tpu.memory_space<vmem>>, %arg1: memref<128x384xbf16, #tpu.memory_space<vmem>>, %arg2: memref<1x128xf32, #tpu.memory_space<vmem>>, %arg3: memref<128x32xf32, #tpu.memory_space<vmem>>, %arg4: memref<1x32xf32, #tpu.memory_space<vmem>>, %arg5: memref<1x32xf32, #tpu.memory_space<vmem>>, %arg6: memref<1x1xf32, #tpu.memory_space<vmem>>, %arg7: memref<2x1xf32, #tpu.memory_space<vmem>>) attributes {dimension_semantics = [], scalar_prefetch = 0 : i64, scratch_operands = 0 : i64, tpu.core_type = #tpu.core_type<tc>} {
    %c0 = arith.constant 0 : index
    %c0_0 = arith.constant 0 : index
    %0 = vector.load %arg1[%c0, %c0_0] : memref<128x384xbf16, #tpu.memory_space<vmem>>, vector<128x384xbf16>
    %c0_1 = arith.constant 0 : index
    %c0_2 = arith.constant 0 : index
    %1 = vector.load %arg2[%c0_1, %c0_2] : memref<1x128xf32, #tpu.memory_space<vmem>>, vector<1x128xf32>
    %2 = vector.shape_cast %1 : vector<1x128xf32> to vector<1x128xf32>
    %3 = vector.broadcast %2 : vector<1x128xf32> to vector<4x128xf32>
    %cst = arith.constant 0.000000e+00 : f32
    %4 = vector.broadcast %cst : f32 to vector<4x128xf32>
    %c0_i32 = arith.constant 0 : i32
    %5 = arith.index_cast %c0_i32 : i32 to index
    %c0_3 = arith.constant 0 : index
    %c0_4 = arith.constant 0 : index
    %6 = vector.load %arg0[%5, %c0_3, %c0_4] : memref<8x4x384xf32, #tpu.memory_space<vmem>>, vector<1x4x384xf32>
    %7 = vector.shape_cast %6 : vector<1x4x384xf32> to vector<4x384xf32>
    %8 = arith.truncf %4 : vector<4x128xf32> to vector<4x128xbf16>
    %cst_5 = arith.constant dense<0.000000e+00> : vector<4x384xf32>
    %9 = tpu.matmul %8, %0, %cst_5 {dimension_numbers = #tpu.dot_dimension_numbers<[1], [0], [0], [1], [0, 0, 1, 1], [], []>} : vector<4x128xbf16>, vector<128x384xbf16>, vector<4x384xf32> -> vector<4x384xf32>
    %10 = vector.extract_strided_slice %7 {offsets = [0, 0], sizes = [4, 128], strides = [1, 1]} : vector<4x384xf32> to vector<4x128xf32>
    %11 = vector.extract_strided_slice %9 {offsets = [0, 0], sizes = [4, 128], strides = [1, 1]} : vector<4x384xf32> to vector<4x128xf32>
    %12 = arith.addf %10, %11 : vector<4x128xf32>
    %13 = arith.negf %12 : vector<4x128xf32>
    %14 = math.exp %13 : vector<4x128xf32>
    %cst_6 = arith.constant 1.000000e+00 : f32
    %15 = vector.broadcast %cst_6 : f32 to vector<4x128xf32>
    %16 = arith.addf %15, %14 : vector<4x128xf32>
    %17 = arith.divf %15, %16 : vector<4x128xf32>
    %18 = vector.extract_strided_slice %7 {offsets = [0, 128], sizes = [4, 128], strides = [1, 1]} : vector<4x384xf32> to vector<4x128xf32>
    %19 = vector.extract_strided_slice %9 {offsets = [0, 128], sizes = [4, 128], strides = [1, 1]} : vector<4x384xf32> to vector<4x128xf32>
    %20 = arith.addf %18, %19 : vector<4x128xf32>
    %21 = arith.negf %20 : vector<4x128xf32>
    %22 = math.exp %21 : vector<4x128xf32>
    %cst_7 = arith.constant 1.000000e+00 : f32
    %23 = vector.broadcast %cst_7 : f32 to vector<4x128xf32>
    %24 = arith.addf %23, %22 : vector<4x128xf32>
    %25 = arith.divf %23, %24 : vector<4x128xf32>
    %26 = vector.extract_strided_slice %7 {offsets = [0, 256], sizes = [4, 128], strides = [1, 1]} : vector<4x384xf32> to vector<4x128xf32>
    %27 = vector.extract_strided_slice %9 {offsets = [0, 256], sizes = [4, 128], strides = [1, 1]} : vector<4x384xf32> to vector<4x128xf32>
    %28 = arith.addf %27, %3 : vector<4x128xf32>
    %29 = arith.mulf %17, %28 : vector<4x128xf32>
    %30 = arith.addf %26, %29 : vector<4x128xf32>
    %31 = math.tanh %30 : vector<4x128xf32>
    %32 = arith.subf %4, %31 : vector<4x128xf32>
    %33 = arith.mulf %25, %32 : vector<4x128xf32>
    %34 = arith.addf %31, %33 : vector<4x128xf32>
    %c1_i32 = arith.constant 1 : i32
    %35 = arith.index_cast %c1_i32 : i32 to index
    %c0_8 = arith.constant 0 : index
    %c0_9 = arith.constant 0 : index
    %36 = vector.load %arg0[%35, %c0_8, %c0_9] : memref<8x4x384xf32, #tpu.memory_space<vmem>>, vector<1x4x384xf32>
    %37 = vector.shape_cast %36 : vector<1x4x384xf32> to vector<4x384xf32>
    %38 = arith.truncf %34 : vector<4x128xf32> to vector<4x128xbf16>
    %cst_10 = arith.constant dense<0.000000e+00> : vector<4x384xf32>
    %39 = tpu.matmul %38, %0, %cst_10 {dimension_numbers = #tpu.dot_dimension_numbers<[1], [0], [0], [1], [0, 0, 1, 1], [], []>} : vector<4x128xbf16>, vector<128x384xbf16>, vector<4x384xf32> -> vector<4x384xf32>
    %40 = vector.extract_strided_slice %37 {offsets = [0, 0], sizes = [4, 128], strides = [1, 1]} : vector<4x384xf32> to vector<4x128xf32>
    %41 = vector.extract_strided_slice %39 {offsets = [0, 0], sizes = [4, 128], strides = [1, 1]} : vector<4x384xf32> to vector<4x128xf32>
    %42 = arith.addf %40, %41 : vector<4x128xf32>
    %43 = arith.negf %42 : vector<4x128xf32>
    %44 = math.exp %43 : vector<4x128xf32>
    %cst_11 = arith.constant 1.000000e+00 : f32
    %45 = vector.broadcast %cst_11 : f32 to vector<4x128xf32>
    %46 = arith.addf %45, %44 : vector<4x128xf32>
    %47 = arith.divf %45, %46 : vector<4x128xf32>
    %48 = vector.extract_strided_slice %37 {offsets = [0, 128], sizes = [4, 128], strides = [1, 1]} : vector<4x384xf32> to vector<4x128xf32>
    %49 = vector.extract_strided_slice %39 {offsets = [0, 128], sizes = [4, 128], strides = [1, 1]} : vector<4x384xf32> to vector<4x128xf32>
    %50 = arith.addf %48, %49 : vector<4x128xf32>
    %51 = arith.negf %50 : vector<4x128xf32>
    %52 = math.exp %51 : vector<4x128xf32>
    %cst_12 = arith.constant 1.000000e+00 : f32
    %53 = vector.broadcast %cst_12 : f32 to vector<4x128xf32>
    %54 = arith.addf %53, %52 : vector<4x128xf32>
    %55 = arith.divf %53, %54 : vector<4x128xf32>
    %56 = vector.extract_strided_slice %37 {offsets = [0, 256], sizes = [4, 128], strides = [1, 1]} : vector<4x384xf32> to vector<4x128xf32>
    %57 = vector.extract_strided_slice %39 {offsets = [0, 256], sizes = [4, 128], strides = [1, 1]} : vector<4x384xf32> to vector<4x128xf32>
    %58 = arith.addf %57, %3 : vector<4x128xf32>
    %59 = arith.mulf %47, %58 : vector<4x128xf32>
    %60 = arith.addf %56, %59 : vector<4x128xf32>
    %61 = math.tanh %60 : vector<4x128xf32>
    %62 = arith.subf %34, %61 : vector<4x128xf32>
    %63 = arith.mulf %55, %62 : vector<4x128xf32>
    %64 = arith.addf %61, %63 : vector<4x128xf32>
    %c2_i32 = arith.constant 2 : i32
    %65 = arith.index_cast %c2_i32 : i32 to index
    %c0_13 = arith.constant 0 : index
    %c0_14 = arith.constant 0 : index
    %66 = vector.load %arg0[%65, %c0_13, %c0_14] : memref<8x4x384xf32, #tpu.memory_space<vmem>>, vector<1x4x384xf32>
    %67 = vector.shape_cast %66 : vector<1x4x384xf32> to vector<4x384xf32>
    %68 = arith.truncf %64 : vector<4x128xf32> to vector<4x128xbf16>
    %cst_15 = arith.constant dense<0.000000e+00> : vector<4x384xf32>
    %69 = tpu.matmul %68, %0, %cst_15 {dimension_numbers = #tpu.dot_dimension_numbers<[1], [0], [0], [1], [0, 0, 1, 1], [], []>} : vector<4x128xbf16>, vector<128x384xbf16>, vector<4x384xf32> -> vector<4x384xf32>
    %70 = vector.extract_strided_slice %67 {offsets = [0, 0], sizes = [4, 128], strides = [1, 1]} : vector<4x384xf32> to vector<4x128xf32>
    %71 = vector.extract_strided_slice %69 {offsets = [0, 0], sizes = [4, 128], strides = [1, 1]} : vector<4x384xf32> to vector<4x128xf32>
    %72 = arith.addf %70, %71 : vector<4x128xf32>
    %73 = arith.negf %72 : vector<4x128xf32>
    %74 = math.exp %73 : vector<4x128xf32>
    %cst_16 = arith.constant 1.000000e+00 : f32
    %75 = vector.broadcast %cst_16 : f32 to vector<4x128xf32>
    %76 = arith.addf %75, %74 : vector<4x128xf32>
    %77 = arith.divf %75, %76 : vector<4x128xf32>
    %78 = vector.extract_strided_slice %67 {offsets = [0, 128], sizes = [4, 128], strides = [1, 1]} : vector<4x384xf32> to vector<4x128xf32>
    %79 = vector.extract_strided_slice %69 {offsets = [0, 128], sizes = [4, 128], strides = [1, 1]} : vector<4x384xf32> to vector<4x128xf32>
    %80 = arith.addf %78, %79 : vector<4x128xf32>
    %81 = arith.negf %80 : vector<4x128xf32>
    %82 = math.exp %81 : vector<4x128xf32>
    %cst_17 = arith.constant 1.000000e+00 : f32
    %83 = vector.broadcast %cst_17 : f32 to vector<4x128xf32>
    %84 = arith.addf %83, %82 : vector<4x128xf32>
    %85 = arith.divf %83, %84 : vector<4x128xf32>
    %86 = vector.extract_strided_slice %67 {offsets = [0, 256], sizes = [4, 128], strides = [1, 1]} : vector<4x384xf32> to vector<4x128xf32>
    %87 = vector.extract_strided_slice %69 {offsets = [0, 256], sizes = [4, 128], strides = [1, 1]} : vector<4x384xf32> to vector<4x128xf32>
    %88 = arith.addf %87, %3 : vector<4x128xf32>
    %89 = arith.mulf %77, %88 : vector<4x128xf32>
    %90 = arith.addf %86, %89 : vector<4x128xf32>
    %91 = math.tanh %90 : vector<4x128xf32>
    %92 = arith.subf %64, %91 : vector<4x128xf32>
    %93 = arith.mulf %85, %92 : vector<4x128xf32>
    %94 = arith.addf %91, %93 : vector<4x128xf32>
    %c3_i32 = arith.constant 3 : i32
    %95 = arith.index_cast %c3_i32 : i32 to index
    %c0_18 = arith.constant 0 : index
    %c0_19 = arith.constant 0 : index
    %96 = vector.load %arg0[%95, %c0_18, %c0_19] : memref<8x4x384xf32, #tpu.memory_space<vmem>>, vector<1x4x384xf32>
    %97 = vector.shape_cast %96 : vector<1x4x384xf32> to vector<4x384xf32>
    %98 = arith.truncf %94 : vector<4x128xf32> to vector<4x128xbf16>
    %cst_20 = arith.constant dense<0.000000e+00> : vector<4x384xf32>
    %99 = tpu.matmul %98, %0, %cst_20 {dimension_numbers = #tpu.dot_dimension_numbers<[1], [0], [0], [1], [0, 0, 1, 1], [], []>} : vector<4x128xbf16>, vector<128x384xbf16>, vector<4x384xf32> -> vector<4x384xf32>
    %100 = vector.extract_strided_slice %97 {offsets = [0, 0], sizes = [4, 128], strides = [1, 1]} : vector<4x384xf32> to vector<4x128xf32>
    %101 = vector.extract_strided_slice %99 {offsets = [0, 0], sizes = [4, 128], strides = [1, 1]} : vector<4x384xf32> to vector<4x128xf32>
    %102 = arith.addf %100, %101 : vector<4x128xf32>
    %103 = arith.negf %102 : vector<4x128xf32>
    %104 = math.exp %103 : vector<4x128xf32>
    %cst_21 = arith.constant 1.000000e+00 : f32
    %105 = vector.broadcast %cst_21 : f32 to vector<4x128xf32>
    %106 = arith.addf %105, %104 : vector<4x128xf32>
    %107 = arith.divf %105, %106 : vector<4x128xf32>
    %108 = vector.extract_strided_slice %97 {offsets = [0, 128], sizes = [4, 128], strides = [1, 1]} : vector<4x384xf32> to vector<4x128xf32>
    %109 = vector.extract_strided_slice %99 {offsets = [0, 128], sizes = [4, 128], strides = [1, 1]} : vector<4x384xf32> to vector<4x128xf32>
    %110 = arith.addf %108, %109 : vector<4x128xf32>
    %111 = arith.negf %110 : vector<4x128xf32>
    %112 = math.exp %111 : vector<4x128xf32>
    %cst_22 = arith.constant 1.000000e+00 : f32
    %113 = vector.broadcast %cst_22 : f32 to vector<4x128xf32>
    %114 = arith.addf %113, %112 : vector<4x128xf32>
    %115 = arith.divf %113, %114 : vector<4x128xf32>
    %116 = vector.extract_strided_slice %97 {offsets = [0, 256], sizes = [4, 128], strides = [1, 1]} : vector<4x384xf32> to vector<4x128xf32>
    %117 = vector.extract_strided_slice %99 {offsets = [0, 256], sizes = [4, 128], strides = [1, 1]} : vector<4x384xf32> to vector<4x128xf32>
    %118 = arith.addf %117, %3 : vector<4x128xf32>
    %119 = arith.mulf %107, %118 : vector<4x128xf32>
    %120 = arith.addf %116, %119 : vector<4x128xf32>
    %121 = math.tanh %120 : vector<4x128xf32>
    %122 = arith.subf %94, %121 : vector<4x128xf32>
    %123 = arith.mulf %115, %122 : vector<4x128xf32>
    %124 = arith.addf %121, %123 : vector<4x128xf32>
    %c4_i32 = arith.constant 4 : i32
    %125 = arith.index_cast %c4_i32 : i32 to index
    %c0_23 = arith.constant 0 : index
    %c0_24 = arith.constant 0 : index
    %126 = vector.load %arg0[%125, %c0_23, %c0_24] : memref<8x4x384xf32, #tpu.memory_space<vmem>>, vector<1x4x384xf32>
    %127 = vector.shape_cast %126 : vector<1x4x384xf32> to vector<4x384xf32>
    %128 = arith.truncf %124 : vector<4x128xf32> to vector<4x128xbf16>
    %cst_25 = arith.constant dense<0.000000e+00> : vector<4x384xf32>
    %129 = tpu.matmul %128, %0, %cst_25 {dimension_numbers = #tpu.dot_dimension_numbers<[1], [0], [0], [1], [0, 0, 1, 1], [], []>} : vector<4x128xbf16>, vector<128x384xbf16>, vector<4x384xf32> -> vector<4x384xf32>
    %130 = vector.extract_strided_slice %127 {offsets = [0, 0], sizes = [4, 128], strides = [1, 1]} : vector<4x384xf32> to vector<4x128xf32>
    %131 = vector.extract_strided_slice %129 {offsets = [0, 0], sizes = [4, 128], strides = [1, 1]} : vector<4x384xf32> to vector<4x128xf32>
    %132 = arith.addf %130, %131 : vector<4x128xf32>
    %133 = arith.negf %132 : vector<4x128xf32>
    %134 = math.exp %133 : vector<4x128xf32>
    %cst_26 = arith.constant 1.000000e+00 : f32
    %135 = vector.broadcast %cst_26 : f32 to vector<4x128xf32>
    %136 = arith.addf %135, %134 : vector<4x128xf32>
    %137 = arith.divf %135, %136 : vector<4x128xf32>
    %138 = vector.extract_strided_slice %127 {offsets = [0, 128], sizes = [4, 128], strides = [1, 1]} : vector<4x384xf32> to vector<4x128xf32>
    %139 = vector.extract_strided_slice %129 {offsets = [0, 128], sizes = [4, 128], strides = [1, 1]} : vector<4x384xf32> to vector<4x128xf32>
    %140 = arith.addf %138, %139 : vector<4x128xf32>
    %141 = arith.negf %140 : vector<4x128xf32>
    %142 = math.exp %141 : vector<4x128xf32>
    %cst_27 = arith.constant 1.000000e+00 : f32
    %143 = vector.broadcast %cst_27 : f32 to vector<4x128xf32>
    %144 = arith.addf %143, %142 : vector<4x128xf32>
    %145 = arith.divf %143, %144 : vector<4x128xf32>
    %146 = vector.extract_strided_slice %127 {offsets = [0, 256], sizes = [4, 128], strides = [1, 1]} : vector<4x384xf32> to vector<4x128xf32>
    %147 = vector.extract_strided_slice %129 {offsets = [0, 256], sizes = [4, 128], strides = [1, 1]} : vector<4x384xf32> to vector<4x128xf32>
    %148 = arith.addf %147, %3 : vector<4x128xf32>
    %149 = arith.mulf %137, %148 : vector<4x128xf32>
    %150 = arith.addf %146, %149 : vector<4x128xf32>
    %151 = math.tanh %150 : vector<4x128xf32>
    %152 = arith.subf %124, %151 : vector<4x128xf32>
    %153 = arith.mulf %145, %152 : vector<4x128xf32>
    %154 = arith.addf %151, %153 : vector<4x128xf32>
    %c5_i32 = arith.constant 5 : i32
    %155 = arith.index_cast %c5_i32 : i32 to index
    %c0_28 = arith.constant 0 : index
    %c0_29 = arith.constant 0 : index
    %156 = vector.load %arg0[%155, %c0_28, %c0_29] : memref<8x4x384xf32, #tpu.memory_space<vmem>>, vector<1x4x384xf32>
    %157 = vector.shape_cast %156 : vector<1x4x384xf32> to vector<4x384xf32>
    %158 = arith.truncf %154 : vector<4x128xf32> to vector<4x128xbf16>
    %cst_30 = arith.constant dense<0.000000e+00> : vector<4x384xf32>
    %159 = tpu.matmul %158, %0, %cst_30 {dimension_numbers = #tpu.dot_dimension_numbers<[1], [0], [0], [1], [0, 0, 1, 1], [], []>} : vector<4x128xbf16>, vector<128x384xbf16>, vector<4x384xf32> -> vector<4x384xf32>
    %160 = vector.extract_strided_slice %157 {offsets = [0, 0], sizes = [4, 128], strides = [1, 1]} : vector<4x384xf32> to vector<4x128xf32>
    %161 = vector.extract_strided_slice %159 {offsets = [0, 0], sizes = [4, 128], strides = [1, 1]} : vector<4x384xf32> to vector<4x128xf32>
    %162 = arith.addf %160, %161 : vector<4x128xf32>
    %163 = arith.negf %162 : vector<4x128xf32>
    %164 = math.exp %163 : vector<4x128xf32>
    %cst_31 = arith.constant 1.000000e+00 : f32
    %165 = vector.broadcast %cst_31 : f32 to vector<4x128xf32>
    %166 = arith.addf %165, %164 : vector<4x128xf32>
    %167 = arith.divf %165, %166 : vector<4x128xf32>
    %168 = vector.extract_strided_slice %157 {offsets = [0, 128], sizes = [4, 128], strides = [1, 1]} : vector<4x384xf32> to vector<4x128xf32>
    %169 = vector.extract_strided_slice %159 {offsets = [0, 128], sizes = [4, 128], strides = [1, 1]} : vector<4x384xf32> to vector<4x128xf32>
    %170 = arith.addf %168, %169 : vector<4x128xf32>
    %171 = arith.negf %170 : vector<4x128xf32>
    %172 = math.exp %171 : vector<4x128xf32>
    %cst_32 = arith.constant 1.000000e+00 : f32
    %173 = vector.broadcast %cst_32 : f32 to vector<4x128xf32>
    %174 = arith.addf %173, %172 : vector<4x128xf32>
    %175 = arith.divf %173, %174 : vector<4x128xf32>
    %176 = vector.extract_strided_slice %157 {offsets = [0, 256], sizes = [4, 128], strides = [1, 1]} : vector<4x384xf32> to vector<4x128xf32>
    %177 = vector.extract_strided_slice %159 {offsets = [0, 256], sizes = [4, 128], strides = [1, 1]} : vector<4x384xf32> to vector<4x128xf32>
    %178 = arith.addf %177, %3 : vector<4x128xf32>
    %179 = arith.mulf %167, %178 : vector<4x128xf32>
    %180 = arith.addf %176, %179 : vector<4x128xf32>
    %181 = math.tanh %180 : vector<4x128xf32>
    %182 = arith.subf %154, %181 : vector<4x128xf32>
    %183 = arith.mulf %175, %182 : vector<4x128xf32>
    %184 = arith.addf %181, %183 : vector<4x128xf32>
    %c6_i32 = arith.constant 6 : i32
    %185 = arith.index_cast %c6_i32 : i32 to index
    %c0_33 = arith.constant 0 : index
    %c0_34 = arith.constant 0 : index
    %186 = vector.load %arg0[%185, %c0_33, %c0_34] : memref<8x4x384xf32, #tpu.memory_space<vmem>>, vector<1x4x384xf32>
    %187 = vector.shape_cast %186 : vector<1x4x384xf32> to vector<4x384xf32>
    %188 = arith.truncf %184 : vector<4x128xf32> to vector<4x128xbf16>
    %cst_35 = arith.constant dense<0.000000e+00> : vector<4x384xf32>
    %189 = tpu.matmul %188, %0, %cst_35 {dimension_numbers = #tpu.dot_dimension_numbers<[1], [0], [0], [1], [0, 0, 1, 1], [], []>} : vector<4x128xbf16>, vector<128x384xbf16>, vector<4x384xf32> -> vector<4x384xf32>
    %190 = vector.extract_strided_slice %187 {offsets = [0, 0], sizes = [4, 128], strides = [1, 1]} : vector<4x384xf32> to vector<4x128xf32>
    %191 = vector.extract_strided_slice %189 {offsets = [0, 0], sizes = [4, 128], strides = [1, 1]} : vector<4x384xf32> to vector<4x128xf32>
    %192 = arith.addf %190, %191 : vector<4x128xf32>
    %193 = arith.negf %192 : vector<4x128xf32>
    %194 = math.exp %193 : vector<4x128xf32>
    %cst_36 = arith.constant 1.000000e+00 : f32
    %195 = vector.broadcast %cst_36 : f32 to vector<4x128xf32>
    %196 = arith.addf %195, %194 : vector<4x128xf32>
    %197 = arith.divf %195, %196 : vector<4x128xf32>
    %198 = vector.extract_strided_slice %187 {offsets = [0, 128], sizes = [4, 128], strides = [1, 1]} : vector<4x384xf32> to vector<4x128xf32>
    %199 = vector.extract_strided_slice %189 {offsets = [0, 128], sizes = [4, 128], strides = [1, 1]} : vector<4x384xf32> to vector<4x128xf32>
    %200 = arith.addf %198, %199 : vector<4x128xf32>
    %201 = arith.negf %200 : vector<4x128xf32>
    %202 = math.exp %201 : vector<4x128xf32>
    %cst_37 = arith.constant 1.000000e+00 : f32
    %203 = vector.broadcast %cst_37 : f32 to vector<4x128xf32>
    %204 = arith.addf %203, %202 : vector<4x128xf32>
    %205 = arith.divf %203, %204 : vector<4x128xf32>
    %206 = vector.extract_strided_slice %187 {offsets = [0, 256], sizes = [4, 128], strides = [1, 1]} : vector<4x384xf32> to vector<4x128xf32>
    %207 = vector.extract_strided_slice %189 {offsets = [0, 256], sizes = [4, 128], strides = [1, 1]} : vector<4x384xf32> to vector<4x128xf32>
    %208 = arith.addf %207, %3 : vector<4x128xf32>
    %209 = arith.mulf %197, %208 : vector<4x128xf32>
    %210 = arith.addf %206, %209 : vector<4x128xf32>
    %211 = math.tanh %210 : vector<4x128xf32>
    %212 = arith.subf %184, %211 : vector<4x128xf32>
    %213 = arith.mulf %205, %212 : vector<4x128xf32>
    %214 = arith.addf %211, %213 : vector<4x128xf32>
    %c7_i32 = arith.constant 7 : i32
    %215 = arith.index_cast %c7_i32 : i32 to index
    %c0_38 = arith.constant 0 : index
    %c0_39 = arith.constant 0 : index
    %216 = vector.load %arg0[%215, %c0_38, %c0_39] : memref<8x4x384xf32, #tpu.memory_space<vmem>>, vector<1x4x384xf32>
    %217 = vector.shape_cast %216 : vector<1x4x384xf32> to vector<4x384xf32>
    %218 = arith.truncf %214 : vector<4x128xf32> to vector<4x128xbf16>
    %cst_40 = arith.constant dense<0.000000e+00> : vector<4x384xf32>
    %219 = tpu.matmul %218, %0, %cst_40 {dimension_numbers = #tpu.dot_dimension_numbers<[1], [0], [0], [1], [0, 0, 1, 1], [], []>} : vector<4x128xbf16>, vector<128x384xbf16>, vector<4x384xf32> -> vector<4x384xf32>
    %220 = vector.extract_strided_slice %217 {offsets = [0, 0], sizes = [4, 128], strides = [1, 1]} : vector<4x384xf32> to vector<4x128xf32>
    %221 = vector.extract_strided_slice %219 {offsets = [0, 0], sizes = [4, 128], strides = [1, 1]} : vector<4x384xf32> to vector<4x128xf32>
    %222 = arith.addf %220, %221 : vector<4x128xf32>
    %223 = arith.negf %222 : vector<4x128xf32>
    %224 = math.exp %223 : vector<4x128xf32>
    %cst_41 = arith.constant 1.000000e+00 : f32
    %225 = vector.broadcast %cst_41 : f32 to vector<4x128xf32>
    %226 = arith.addf %225, %224 : vector<4x128xf32>
    %227 = arith.divf %225, %226 : vector<4x128xf32>
    %228 = vector.extract_strided_slice %217 {offsets = [0, 128], sizes = [4, 128], strides = [1, 1]} : vector<4x384xf32> to vector<4x128xf32>
    %229 = vector.extract_strided_slice %219 {offsets = [0, 128], sizes = [4, 128], strides = [1, 1]} : vector<4x384xf32> to vector<4x128xf32>
    %230 = arith.addf %228, %229 : vector<4x128xf32>
    %231 = arith.negf %230 : vector<4x128xf32>
    %232 = math.exp %231 : vector<4x128xf32>
    %cst_42 = arith.constant 1.000000e+00 : f32
    %233 = vector.broadcast %cst_42 : f32 to vector<4x128xf32>
    %234 = arith.addf %233, %232 : vector<4x128xf32>
    %235 = arith.divf %233, %234 : vector<4x128xf32>
    %236 = vector.extract_strided_slice %217 {offsets = [0, 256], sizes = [4, 128], strides = [1, 1]} : vector<4x384xf32> to vector<4x128xf32>
    %237 = vector.extract_strided_slice %219 {offsets = [0, 256], sizes = [4, 128], strides = [1, 1]} : vector<4x384xf32> to vector<4x128xf32>
    %238 = arith.addf %237, %3 : vector<4x128xf32>
    %239 = arith.mulf %227, %238 : vector<4x128xf32>
    %240 = arith.addf %236, %239 : vector<4x128xf32>
    %241 = math.tanh %240 : vector<4x128xf32>
    %242 = arith.subf %214, %241 : vector<4x128xf32>
    %243 = arith.mulf %235, %242 : vector<4x128xf32>
    %244 = arith.addf %241, %243 : vector<4x128xf32>
    %c8_i32 = arith.constant 8 : i32
    %245 = vector.extract_strided_slice %244 {offsets = [0, 0], sizes = [2, 128], strides = [1, 1]} : vector<4x128xf32> to vector<2x128xf32>
    %246 = vector.extract_strided_slice %244 {offsets = [2, 0], sizes = [2, 128], strides = [1, 1]} : vector<4x128xf32> to vector<2x128xf32>
    %247 = arith.subf %245, %246 : vector<2x128xf32>
    %248 = math.absf %247 : vector<2x128xf32>
    %c0_43 = arith.constant 0 : index
    %c0_44 = arith.constant 0 : index
    %249 = vector.load %arg3[%c0_43, %c0_44] : memref<128x32xf32, #tpu.memory_space<vmem>>, vector<128x32xf32>
    %cst_45 = arith.constant dense<0.000000e+00> : vector<2x32xf32>
    %250 = tpu.matmul %248, %249, %cst_45 {dimension_numbers = #tpu.dot_dimension_numbers<[1], [0], [0], [1], [0, 0, 1, 1], [], []>} : vector<2x128xf32>, vector<128x32xf32>, vector<2x32xf32> -> vector<2x32xf32>
    %c0_46 = arith.constant 0 : index
    %c0_47 = arith.constant 0 : index
    %251 = vector.load %arg4[%c0_46, %c0_47] : memref<1x32xf32, #tpu.memory_space<vmem>>, vector<1x32xf32>
    %252 = vector.broadcast %251 : vector<1x32xf32> to vector<2x32xf32>
    %253 = arith.addf %250, %252 : vector<2x32xf32>
    %cst_48 = arith.constant 0.000000e+00 : f32
    %254 = vector.broadcast %cst_48 : f32 to vector<2x32xf32>
    %255 = arith.maximumf %253, %254 : vector<2x32xf32>
    %c0_49 = arith.constant 0 : index
    %c0_50 = arith.constant 0 : index
    %256 = vector.load %arg5[%c0_49, %c0_50] : memref<1x32xf32, #tpu.memory_space<vmem>>, vector<1x32xf32>
    %257 = vector.broadcast %256 : vector<1x32xf32> to vector<2x32xf32>
    %258 = arith.mulf %255, %257 : vector<2x32xf32>
    %cst_51 = arith.constant dense<0.000000e+00> : vector<2xf32>
    %259 = vector.multi_reduction <add>, %258, %cst_51 [1] : vector<2x32xf32> to vector<2xf32>
    %260 = vector.shape_cast %259 : vector<2xf32> to vector<2x1xf32>
    %c0_52 = arith.constant 0 : index
    %c0_53 = arith.constant 0 : index
    %261 = vector.load %arg6[%c0_52, %c0_53] : memref<1x1xf32, #tpu.memory_space<vmem>>, vector<1x1xf32>
    %262 = vector.broadcast %261 : vector<1x1xf32> to vector<2x1xf32>
    %263 = arith.addf %260, %262 : vector<2x1xf32>
    %264 = arith.negf %263 : vector<2x1xf32>
    %265 = math.exp %264 : vector<2x1xf32>
    %cst_54 = arith.constant 1.000000e+00 : f32
    %266 = vector.broadcast %cst_54 : f32 to vector<2x1xf32>
    %267 = arith.addf %266, %265 : vector<2x1xf32>
    %268 = arith.divf %266, %267 : vector<2x1xf32>
    %c0_55 = arith.constant 0 : index
    %c0_56 = arith.constant 0 : index
    %269 = vector.load %arg7[%c0_55, %c0_56] : memref<2x1xf32, #tpu.memory_space<vmem>>, vector<2x1xf32>
    tpu.vector_store %arg7[%c0_55, %c0_56], %268 {strides = array<i32>} : memref<2x1xf32, #tpu.memory_space<vmem>>, vector<2x1xf32>,
    return
  }
}

</mosaic_0001>

<llo_original>
// kernel: keypress_gru_forward.1
$region0: #{keypress_gru_forward.1}
  #allocation0 [shape = 'u32[]', space=smem, size = 0x4, offset = 0x4, fixed_abs, tag = 'smem constant byte address 0x4 - core index']
  #allocation1 [shape = 'u32[72,128]{1,0:T(1,128)}', space=vmem, size = 0x9000, scoped, tag = 'internal scratch']
  #allocation2 [shape = 'f32[1,1]{1,0:T(1,128)S(1)}', space=vmem, size = 0x200, scoped, tag = 'scoped memory for keypress_gru_forward.1']
  %s0 = inlined_call_operand.vmem [shape: f32[8,4,384], index: 0, kind: input, shape index: {}]
  %s1 = inlined_call_operand.vmem [shape: bf16[128,384], index: 1, kind: input, shape index: {}]
  %s2 = inlined_call_operand.vmem [shape: f32[1,128], index: 2, kind: input, shape index: {}]
  %s3 = inlined_call_operand.vmem [shape: f32[128,32], index: 3, kind: input, shape index: {}]
  %s4 = inlined_call_operand.vmem [shape: f32[1,32], index: 4, kind: input, shape index: {}]
  %s5 = inlined_call_operand.vmem [shape: f32[1,32], index: 5, kind: input, shape index: {}]
  %s6 = inlined_call_operand.<no memory space> [shape: f32[1,1], index: 6, kind: input, shape index: {}]
  %s7 = inlined_call_operand.vmem [shape: f32[2,1], index: 7, kind: output, shape index: {}]
  %s8 = sld [smem:[#allocation0]]
  $region38: #{keypress_gru_forward.1} parent=0
    _
  %s10 = ssub.s32 1, %s8
  %s11 = scalar_select 0, %s10, %s8
  %v12 = vstv %s6
  %13 = vst [vmem:[#allocation2] sm:$0x1] %v12
  // Predicated region
  $region2: #{keypress_gru_forward.1} parent=0 // pred_check
    _
  $region3: #{keypress_gru_forward.1} parent=0 // pred_check_branch
    %15 = sbr.rel (0) target = $region5
  $region4: #{keypress_gru_forward.1} parent=0 // pred_region
    _
  $region5: #{keypress_gru_forward.1} parent=0 // pred_fallthru
    _
  // Predicated region
  $region6: #{keypress_gru_forward.1} parent=0 // pred_check
    _
  $region7: #{keypress_gru_forward.1} parent=0 // pred_check_branch
    %17 = sbr.rel (0) target = $region9
  $region8: #{keypress_gru_forward.1} parent=0 // pred_region
    _
  $region9: #{keypress_gru_forward.1} parent=0 // pred_fallthru
    _
  // Predicated region
  $region10: #{keypress_gru_forward.1} parent=0 // pred_check
    _
  $region11: #{keypress_gru_forward.1} parent=0 // pred_check_branch
    %19 = sbr.rel (0) target = $region13
  $region12: #{keypress_gru_forward.1} parent=0 // pred_region
    _
  $region13: #{keypress_gru_forward.1} parent=0 // pred_fallthru
    _
  // Predicated region
  $region14: #{keypress_gru_forward.1} parent=0 // pred_check
    _
  $region15: #{keypress_gru_forward.1} parent=0 // pred_check_branch
    %21 = sbr.rel (0) target = $region17
  $region16: #{keypress_gru_forward.1} parent=0 // pred_region
    _
  $region17: #{keypress_gru_forward.1} parent=0 // pred_fallthru
    _
  // Predicated region
  $region18: #{keypress_gru_forward.1} parent=0 // pred_check
    _
  $region19: #{keypress_gru_forward.1} parent=0 // pred_check_branch
    %23 = sbr.rel (0) target = $region21
  $region20: #{keypress_gru_forward.1} parent=0 // pred_region
    _
  $region21: #{keypress_gru_forward.1} parent=0 // pred_fallthru
    _
  // Predicated region
  $region22: #{keypress_gru_forward.1} parent=0 // pred_check
    _
  $region23: #{keypress_gru_forward.1} parent=0 // pred_check_branch
    %25 = sbr.rel (0) target = $region25
  $region24: #{keypress_gru_forward.1} parent=0 // pred_region
    _
  $region25: #{keypress_gru_forward.1} parent=0 // pred_fallthru
    _
  // Predicated region
  $region26: #{keypress_gru_forward.1} parent=0 // pred_check
    _
  $region27: #{keypress_gru_forward.1} parent=0 // pred_check_branch
    %27 = sbr.rel (0) target = $region29
  $region28: #{keypress_gru_forward.1} parent=0 // pred_region
    _
  $region29: #{keypress_gru_forward.1} parent=0 // pred_fallthru
    _
  %v29 = vld [vmem:[%s1] sm:$0xff]
  %v30 = vld [vmem:[%s1 + $0x8] sm:$0xf]
  %v31 = vld [vmem:[%s1 + $0xc] sm:$0xff]
  %v32 = vld [vmem:[%s1 + $0x14] sm:$0xf]
  %v33 = vld [vmem:[%s1 + $0x18] sm:$0xff]
  %v34 = vld [vmem:[%s1 + $0x20] sm:$0xf]
  %v35 = vld [vmem:[%s1 + $0x24] sm:$0xff]
  %v36 = vld [vmem:[%s1 + $0x2c] sm:$0xf]
  %v37 = vld [vmem:[%s1 + $0x30] sm:$0xff]
  %v38 = vld [vmem:[%s1 + $0x38] sm:$0xf]
  %v39 = vld [vmem:[%s1 + $0x3c] sm:$0xff]
  %v40 = vld [vmem:[%s1 + $0x44] sm:$0xf]
  %v41 = vld [vmem:[%s1 + $0x48] sm:$0xff]
  %v42 = vld [vmem:[%s1 + $0x50] sm:$0xf]
  %v43 = vld [vmem:[%s1 + $0x54] sm:$0xff]
  %v44 = vld [vmem:[%s1 + $0x5c] sm:$0xf]
  %v45 = vld [vmem:[%s1 + $0x60] sm:$0xff]
  %v46 = vld [vmem:[%s1 + $0x68] sm:$0xf]
  %v47 = vld [vmem:[%s1 + $0x6c] sm:$0xff]
  %v48 = vld [vmem:[%s1 + $0x74] sm:$0xf]
  %v49 = vld [vmem:[%s1 + $0x78] sm:$0xff]
  %v50 = vld [vmem:[%s1 + $0x80] sm:$0xf]
  %v51 = vld [vmem:[%s1 + $0x84] sm:$0xff]
  %v52 = vld [vmem:[%s1 + $0x8c] sm:$0xf]
  %v53 = vld [vmem:[%s1 + $0x90] sm:$0xff]
  %v54 = vld [vmem:[%s1 + $0x98] sm:$0xf]
  %v55 = vld [vmem:[%s1 + $0x9c] sm:$0xff]
  %v56 = vld [vmem:[%s1 + $0xa4] sm:$0xf]
  %v57 = vld [vmem:[%s1 + $0xa8] sm:$0xff]
  %v58 = vld [vmem:[%s1 + $0xb0] sm:$0xf]
  %v59 = vld [vmem:[%s1 + $0xb4] sm:$0xff]
  %v60 = vld [vmem:[%s1 + $0xbc] sm:$0xf]
  %v61 = vld [vmem:[%s2] sm:$0x1]
  %v63 = vperm.slane %v61, 0
  %v65 = vld [vmem:[%s0] sm:$0xff]
  %v66 = vld [vmem:[%s0 + $0x8] sm:$0xf]
  %v99 = vunpack.c.l.b16 %v29
  %v100 = vunpack.c.h.b16 %v29
  %v101 = vunpack.c.l.b16 %v30
  %v102 = vunpack.c.l.b16 %v31
  %v103 = vunpack.c.h.b16 %v31
  %v104 = vunpack.c.l.b16 %v32
  %v105 = vunpack.c.l.b16 %v33
  %v106 = vunpack.c.h.b16 %v33
  %v107 = vunpack.c.l.b16 %v34
  %v108 = vunpack.c.l.b16 %v35
  %v109 = vunpack.c.h.b16 %v35
  %v110 = vunpack.c.l.b16 %v36
  %v111 = vunpack.c.l.b16 %v37
  %v112 = vunpack.c.h.b16 %v37
  %v113 = vunpack.c.l.b16 %v38
  %v114 = vunpack.c.l.b16 %v39
  %v115 = vunpack.c.h.b16 %v39
  %v116 = vunpack.c.l.b16 %v40
  %v117 = vunpack.c.l.b16 %v41
  %v118 = vunpack.c.h.b16 %v41
  %v119 = vunpack.c.l.b16 %v42
  %v120 = vunpack.c.l.b16 %v43
  %v121 = vunpack.c.h.b16 %v43
  %v122 = vunpack.c.l.b16 %v44
  %v123 = vunpack.c.l.b16 %v45
  %v124 = vunpack.c.h.b16 %v45
  %v125 = vunpack.c.l.b16 %v46
  %v126 = vunpack.c.l.b16 %v47
  %v127 = vunpack.c.h.b16 %v47
  %v128 = vunpack.c.l.b16 %v48
  %v129 = vunpack.c.l.b16 %v49
  %v130 = vunpack.c.h.b16 %v49
  %v131 = vunpack.c.l.b16 %v50
  %v132 = vunpack.c.l.b16 %v51
  %v133 = vunpack.c.h.b16 %v51
  %v134 = vunpack.c.l.b16 %v52
  %v135 = vunpack.c.l.b16 %v53
  %v136 = vunpack.c.h.b16 %v53
  %v137 = vunpack.c.l.b16 %v54
  %v138 = vunpack.c.l.b16 %v55
  %v139 = vunpack.c.h.b16 %v55
  %v140 = vunpack.c.l.b16 %v56
  %v141 = vunpack.c.l.b16 %v57
  %v142 = vunpack.c.h.b16 %v57
  %v143 = vunpack.c.l.b16 %v58
  %v144 = vunpack.c.l.b16 %v59
  %v145 = vunpack.c.h.b16 %v59
  %v146 = vunpack.c.l.b16 %v60
  %v147 = vpack.c.b16 %v102, %v99
  %v148 = vpack.c.b16 %v103, %v100
  %v149 = vpack.c.b16 %v104, %v101
  %v150 = vpack.c.b16 %v108, %v105
  %v151 = vpack.c.b16 %v109, %v106
  %v152 = vpack.c.b16 %v110, %v107
  %v153 = vpack.c.b16 %v114, %v111
  %v154 = vpack.c.b16 %v115, %v112
  %v155 = vpack.c.b16 %v116, %v113
  %v156 = vpack.c.b16 %v120, %v117
  %v157 = vpack.c.b16 %v121, %v118
  %v158 = vpack.c.b16 %v122, %v119
  %v159 = vpack.c.b16 %v126, %v123
  %v160 = vpack.c.b16 %v127, %v124
  %v161 = vpack.c.b16 %v128, %v125
  %v162 = vpack.c.b16 %v132, %v129
  %v163 = vpack.c.b16 %v133, %v130
  %v164 = vpack.c.b16 %v134, %v131
  %v165 = vpack.c.b16 %v138, %v135
  %v166 = vpack.c.b16 %v139, %v136
  %v167 = vpack.c.b16 %v140, %v137
  %v168 = vpack.c.b16 %v144, %v141
  %v169 = vpack.c.b16 %v145, %v142
  %v170 = vpack.c.b16 %v146, %v143
  %195 = vmatpush.bf16.msra.mxu0 %v168
  %196 = vmatpush.bf16.msra.mxu0 %v165
  %197 = vmatpush.bf16.msra.mxu0 %v162
  %198 = vmatpush.bf16.msra.mxu0 %v159
  %199 = vmatpush.bf16.msra.mxu0 %v156
  %200 = vmatpush.bf16.msra.mxu0 %v153
  %201 = vmatpush.bf16.msra.mxu0 %v150
  %202 = vmatpush.bf16.msra.mxu0 %v147
  %203 = vmatmul.bf16.gmra.mxu0 0
  %v204 = vpop.f32.mrf.mxu0
  %v205 = vadd.f32 0.0, %v204
  %v206 = vpop.f32.mrf.mxu0
  %207 = vdwg.mxu0
  %208 = vmatpush.bf16.msra.mxu0 %v169
  %209 = vmatpush.bf16.msra.mxu0 %v166
  %210 = vmatpush.bf16.msra.mxu0 %v163
  %211 = vmatpush.bf16.msra.mxu0 %v160
  %212 = vmatpush.bf16.msra.mxu0 %v157
  %213 = vmatpush.bf16.msra.mxu0 %v154
  %214 = vmatpush.bf16.msra.mxu0 %v151
  %215 = vmatpush.bf16.msra.mxu0 %v148
  %216 = vmatmul.bf16.gmra.mxu0 0
  %v217 = vpop.f32.mrf.mxu0
  %v218 = vadd.f32 0.0, %v217
  %v219 = vpop.f32.mrf.mxu0
  %220 = vdwg.mxu0
  %221 = vmatpush.bf16.msra.mxu0 %v170
  %222 = vmatpush.bf16.msra.mxu0 %v167
  %223 = vmatpush.bf16.msra.mxu0 %v164
  %224 = vmatpush.bf16.msra.mxu0 %v161
  %225 = vmatpush.bf16.msra.mxu0 %v158
  %226 = vmatpush.bf16.msra.mxu0 %v155
  %227 = vmatpush.bf16.msra.mxu0 %v152
  %228 = vmatpush.bf16.msra.mxu0 %v149
  %229 = vmatmul.bf16.gmra.mxu0 0
  %v230 = vpop.f32.mrf.mxu0
  %v231 = vadd.f32 0.0, %v230
  %v232 = vpop.f32.mrf.mxu0
  %233 = vdwg.mxu0
  %v234 = vadd.f32 %v65, %v205
  %v235 = vxor.u32 %v234, 2147483648
  %v236 = vmul.f32 %v235, 1.442695
  %v237 = vpow.pop %v236
  %v238 = vadd.f32 %v237, 1.0
  %v239 = vrcp.pop %v238
  %v240 = vmul.f32 %v238, %v239
  %v241 = vsub.f32 1.0, %v240
  %v242 = vmul.f32 %v239, %v241
  %v243 = vadd.f32 %v239, %v242
  %vm244 = vweird.f32 %v238
  %vm245 = vweird.f32 %v239
  %vm246 = vmor %vm244, %vm245
  %v247 = vsel %vm246, %v239, %v243
  %v248 = vand.u32 2147483647, %v238
  %vm249 = vcmp.eq.f32.partialorder %v248, 8.507059e+37
  %v250 = vand.u32 %v238, 2147483648
  %v251 = vor.u32 1.1754944e-38, %v250
  %v252 = vsel %vm249, %v251, %v247
  %v253 = vmul.f32 1.0, %v252
  %v255 = vrot.slane %v65, 4
  %v257 = vadd.f32 %v255, %v218
  %v258 = vxor.u32 %v257, 2147483648
  %v259 = vmul.f32 %v258, 1.442695
  %v260 = vpow.pop %v259
  %v261 = vadd.f32 %v260, 1.0
  %v262 = vrcp.pop %v261
  %v263 = vmul.f32 %v261, %v262
  %v264 = vsub.f32 1.0, %v263
  %v265 = vmul.f32 %v262, %v264
  %v266 = vadd.f32 %v262, %v265
  %vm267 = vweird.f32 %v261
  %vm268 = vweird.f32 %v262
  %vm269 = vmor %vm267, %vm268
  %v270 = vsel %vm269, %v262, %v266
  %v271 = vand.u32 2147483647, %v261
  %vm272 = vcmp.eq.f32.partialorder %v271, 8.507059e+37
  %v273 = vand.u32 %v261, 2147483648
  %v274 = vor.u32 1.1754944e-38, %v273
  %v275 = vsel %vm272, %v274, %v270
  %v276 = vmul.f32 1.0, %v275
  %v277 = vadd.f32 %v231, %v63
  %v278 = vmul.f32 %v253, %v277
  %v279 = vadd.f32 %v66, %v278
  %v280 = vtanh.pop %v279
  %v281 = vsub.f32 0.0, %v280
  %v282 = vmul.f32 %v276, %v281
  %v283 = vadd.f32 %v280, %v282
  %s284 = scalar_lea.vmem %s0, 12
  %v285 = vld [vmem:[%s284] sm:$0xff]
  %v286 = vld [vmem:[%s284 + $0x8] sm:$0xf]
  %v287 = vpack.c.bf16 %v283, %v283
  %288 = vmatpush.bf16.msra.mxu0 %v168
  %289 = vmatpush.bf16.msra.mxu0 %v165
  %290 = vmatpush.bf16.msra.mxu0 %v162
  %291 = vmatpush.bf16.msra.mxu0 %v159
  %292 = vmatpush.bf16.msra.mxu0 %v156
  %293 = vmatpush.bf16.msra.mxu0 %v153
  %294 = vmatpush.bf16.msra.mxu0 %v150
  %295 = vmatpush.bf16.msra.mxu0 %v147
  %296 = vmatmul.bf16.gmra.mxu0 %v287
  %v297 = vpop.f32.mrf.mxu0
  %v298 = vadd.f32 0.0, %v297
  %v299 = vpop.f32.mrf.mxu0
  %300 = vdwg.mxu0
  %301 = vmatpush.bf16.msra.mxu0 %v169
  %302 = vmatpush.bf16.msra.mxu0 %v166
  %303 = vmatpush.bf16.msra.mxu0 %v163
  %304 = vmatpush.bf16.msra.mxu0 %v160
  %305 = vmatpush.bf16.msra.mxu0 %v157
  %306 = vmatpush.bf16.msra.mxu0 %v154
  %307 = vmatpush.bf16.msra.mxu0 %v151
  %308 = vmatpush.bf16.msra.mxu0 %v148
  %309 = vmatmul.bf16.gmra.mxu0 %v287
  %v310 = vpop.f32.mrf.mxu0
  %v311 = vadd.f32 0.0, %v310
  %v312 = vpop.f32.mrf.mxu0
  %313 = vdwg.mxu0
  %314 = vmatpush.bf16.msra.mxu0 %v170
  %315 = vmatpush.bf16.msra.mxu0 %v167
  %316 = vmatpush.bf16.msra.mxu0 %v164
  %317 = vmatpush.bf16.msra.mxu0 %v161
  %318 = vmatpush.bf16.msra.mxu0 %v158
  %319 = vmatpush.bf16.msra.mxu0 %v155
  %320 = vmatpush.bf16.msra.mxu0 %v152
  %321 = vmatpush.bf16.msra.mxu0 %v149
  %322 = vmatmul.bf16.gmra.mxu0 %v287
  %v323 = vpop.f32.mrf.mxu0
  %v324 = vadd.f32 0.0, %v323
  %v325 = vpop.f32.mrf.mxu0
  %326 = vdwg.mxu0
  %v327 = vadd.f32 %v285, %v298
  %v328 = vxor.u32 %v327, 2147483648
  %v329 = vmul.f32 %v328, 1.442695
  %v330 = vpow.pop %v329
  %v331 = vadd.f32 %v330, 1.0
  %v332 = vrcp.pop %v331
  %v333 = vmul.f32 %v331, %v332
  %v334 = vsub.f32 1.0, %v333
  %v335 = vmul.f32 %v332, %v334
  %v336 = vadd.f32 %v332, %v335
  %vm337 = vweird.f32 %v331
  %vm338 = vweird.f32 %v332
  %vm339 = vmor %vm337, %vm338
  %v340 = vsel %vm339, %v332, %v336
  %v341 = vand.u32 2147483647, %v331
  %vm342 = vcmp.eq.f32.partialorder %v341, 8.507059e+37
  %v343 = vand.u32 %v331, 2147483648
  %v344 = vor.u32 1.1754944e-38, %v343
  %v345 = vsel %vm342, %v344, %v340
  %v346 = vmul.f32 1.0, %v345
  %v348 = vrot.slane %v285, 4
  %v350 = vadd.f32 %v348, %v311
  %v351 = vxor.u32 %v350, 2147483648
  %v352 = vmul.f32 %v351, 1.442695
  %v353 = vpow.pop %v352
  %v354 = vadd.f32 %v353, 1.0
  %v355 = vrcp.pop %v354
  %v356 = vmul.f32 %v354, %v355
  %v357 = vsub.f32 1.0, %v356
  %v358 = vmul.f32 %v355, %v357
  %v359 = vadd.f32 %v355, %v358
  %vm360 = vweird.f32 %v354
  %vm361 = vweird.f32 %v355
  %vm362 = vmor %vm360, %vm361
  %v363 = vsel %vm362, %v355, %v359
  %v364 = vand.u32 2147483647, %v354
  %vm365 = vcmp.eq.f32.partialorder %v364, 8.507059e+37
  %v366 = vand.u32 %v354, 2147483648
  %v367 = vor.u32 1.1754944e-38, %v366
  %v368 = vsel %vm365, %v367, %v363
  %v369 = vmul.f32 1.0, %v368
  %v370 = vadd.f32 %v324, %v63
  %v371 = vmul.f32 %v346, %v370
  %v372 = vadd.f32 %v286, %v371
  %v373 = vtanh.pop %v372
  %v374 = vsub.f32 %v283, %v373
  %v375 = vmul.f32 %v369, %v374
  %v376 = vadd.f32 %v373, %v375
  %s377 = scalar_lea.vmem %s0, 24
  %v378 = vld [vmem:[%s377] sm:$0xff]
  %v379 = vld [vmem:[%s377 + $0x8] sm:$0xf]
  %v380 = vpack.c.bf16 %v376, %v376
  %381 = vmatpush.bf16.msra.mxu0 %v168
  %382 = vmatpush.bf16.msra.mxu0 %v165
  %383 = vmatpush.bf16.msra.mxu0 %v162
  %384 = vmatpush.bf16.msra.mxu0 %v159
  %385 = vmatpush.bf16.msra.mxu0 %v156
  %386 = vmatpush.bf16.msra.mxu0 %v153
  %387 = vmatpush.bf16.msra.mxu0 %v150
  %388 = vmatpush.bf16.msra.mxu0 %v147
  %389 = vmatmul.bf16.gmra.mxu0 %v380
  %v390 = vpop.f32.mrf.mxu0
  %v391 = vadd.f32 0.0, %v390
  %v392 = vpop.f32.mrf.mxu0
  %393 = vdwg.mxu0
  %394 = vmatpush.bf16.msra.mxu0 %v169
  %395 = vmatpush.bf16.msra.mxu0 %v166
  %396 = vmatpush.bf16.msra.mxu0 %v163
  %397 = vmatpush.bf16.msra.mxu0 %v160
  %398 = vmatpush.bf16.msra.mxu0 %v157
  %399 = vmatpush.bf16.msra.mxu0 %v154
  %400 = vmatpush.bf16.msra.mxu0 %v151
  %401 = vmatpush.bf16.msra.mxu0 %v148
  %402 = vmatmul.bf16.gmra.mxu0 %v380
  %v403 = vpop.f32.mrf.mxu0
  %v404 = vadd.f32 0.0, %v403
  %v405 = vpop.f32.mrf.mxu0
  %406 = vdwg.mxu0
  %407 = vmatpush.bf16.msra.mxu0 %v170
  %408 = vmatpush.bf16.msra.mxu0 %v167
  %409 = vmatpush.bf16.msra.mxu0 %v164
  %410 = vmatpush.bf16.msra.mxu0 %v161
  %411 = vmatpush.bf16.msra.mxu0 %v158
  %412 = vmatpush.bf16.msra.mxu0 %v155
  %413 = vmatpush.bf16.msra.mxu0 %v152
  %414 = vmatpush.bf16.msra.mxu0 %v149
  %415 = vmatmul.bf16.gmra.mxu0 %v380
  %v416 = vpop.f32.mrf.mxu0
  %v417 = vadd.f32 0.0, %v416
  %v418 = vpop.f32.mrf.mxu0
  %419 = vdwg.mxu0
  %v420 = vadd.f32 %v378, %v391
  %v421 = vxor.u32 %v420, 2147483648
  %v422 = vmul.f32 %v421, 1.442695
  %v423 = vpow.pop %v422
  %v424 = vadd.f32 %v423, 1.0
  %v425 = vrcp.pop %v424
  %v426 = vmul.f32 %v424, %v425
  %v427 = vsub.f32 1.0, %v426
  %v428 = vmul.f32 %v425, %v427
  %v429 = vadd.f32 %v425, %v428
  %vm430 = vweird.f32 %v424
  %vm431 = vweird.f32 %v425
  %vm432 = vmor %vm430, %vm431
  %v433 = vsel %vm432, %v425, %v429
  %v434 = vand.u32 2147483647, %v424
  %vm435 = vcmp.eq.f32.partialorder %v434, 8.507059e+37
  %v436 = vand.u32 %v424, 2147483648
  %v437 = vor.u32 1.1754944e-38, %v436
  %v438 = vsel %vm435, %v437, %v433
  %v439 = vmul.f32 1.0, %v438
  %v441 = vrot.slane %v378, 4
  %v443 = vadd.f32 %v441, %v404
  %v444 = vxor.u32 %v443, 2147483648
  %v445 = vmul.f32 %v444, 1.442695
  %v446 = vpow.pop %v445
  %v447 = vadd.f32 %v446, 1.0
  %v448 = vrcp.pop %v447
  %v449 = vmul.f32 %v447, %v448
  %v450 = vsub.f32 1.0, %v449
  %v451 = vmul.f32 %v448, %v450
  %v452 = vadd.f32 %v448, %v451
  %vm453 = vweird.f32 %v447
  %vm454 = vweird.f32 %v448
  %vm455 = vmor %vm453, %vm454
  %v456 = vsel %vm455, %v448, %v452
  %v457 = vand.u32 2147483647, %v447
  %vm458 = vcmp.eq.f32.partialorder %v457, 8.507059e+37
  %v459 = vand.u32 %v447, 2147483648
  %v460 = vor.u32 1.1754944e-38, %v459
  %v461 = vsel %vm458, %v460, %v456
  %v462 = vmul.f32 1.0, %v461
  %v463 = vadd.f32 %v417, %v63
  %v464 = vmul.f32 %v439, %v463
  %v465 = vadd.f32 %v379, %v464
  %v466 = vtanh.pop %v465
  %v467 = vsub.f32 %v376, %v466
  %v468 = vmul.f32 %v462, %v467
  %v469 = vadd.f32 %v466, %v468
  %s470 = scalar_lea.vmem %s0, 36
  %v471 = vld [vmem:[%s470] sm:$0xff]
  %v472 = vld [vmem:[%s470 + $0x8] sm:$0xf]
  %v473 = vpack.c.bf16 %v469, %v469
  %474 = vmatpush.bf16.msra.mxu0 %v168
  %475 = vmatpush.bf16.msra.mxu0 %v165
  %476 = vmatpush.bf16.msra.mxu0 %v162
  %477 = vmatpush.bf16.msra.mxu0 %v159
  %478 = vmatpush.bf16.msra.mxu0 %v156
  %479 = vmatpush.bf16.msra.mxu0 %v153
  %480 = vmatpush.bf16.msra.mxu0 %v150
  %481 = vmatpush.bf16.msra.mxu0 %v147
  %482 = vmatmul.bf16.gmra.mxu0 %v473
  %v483 = vpop.f32.mrf.mxu0
  %v484 = vadd.f32 0.0, %v483
  %v485 = vpop.f32.mrf.mxu0
  %486 = vdwg.mxu0
  %487 = vmatpush.bf16.msra.mxu0 %v169
  %488 = vmatpush.bf16.msra.mxu0 %v166
  %489 = vmatpush.bf16.msra.mxu0 %v163
  %490 = vmatpush.bf16.msra.mxu0 %v160
  %491 = vmatpush.bf16.msra.mxu0 %v157
  %492 = vmatpush.bf16.msra.mxu0 %v154
  %493 = vmatpush.bf16.msra.mxu0 %v151
  %494 = vmatpush.bf16.msra.mxu0 %v148
  %495 = vmatmul.bf16.gmra.mxu0 %v473
  %v496 = vpop.f32.mrf.mxu0
  %v497 = vadd.f32 0.0, %v496
  %v498 = vpop.f32.mrf.mxu0
  %499 = vdwg.mxu0
  %500 = vmatpush.bf16.msra.mxu0 %v170
  %501 = vmatpush.bf16.msra.mxu0 %v167
  %502 = vmatpush.bf16.msra.mxu0 %v164
  %503 = vmatpush.bf16.msra.mxu0 %v161
  %504 = vmatpush.bf16.msra.mxu0 %v158
  %505 = vmatpush.bf16.msra.mxu0 %v155
  %506 = vmatpush.bf16.msra.mxu0 %v152
  %507 = vmatpush.bf16.msra.mxu0 %v149
  %508 = vmatmul.bf16.gmra.mxu0 %v473
  %v509 = vpop.f32.mrf.mxu0
  %v510 = vadd.f32 0.0, %v509
  %v511 = vpop.f32.mrf.mxu0
  %512 = vdwg.mxu0
  %v513 = vadd.f32 %v471, %v484
  %v514 = vxor.u32 %v513, 2147483648
  %v515 = vmul.f32 %v514, 1.442695
  %v516 = vpow.pop %v515
  %v517 = vadd.f32 %v516, 1.0
  %v518 = vrcp.pop %v517
  %v519 = vmul.f32 %v517, %v518
  %v520 = vsub.f32 1.0, %v519
  %v521 = vmul.f32 %v518, %v520
  %v522 = vadd.f32 %v518, %v521
  %vm523 = vweird.f32 %v517
  %vm524 = vweird.f32 %v518
  %vm525 = vmor %vm523, %vm524
  %v526 = vsel %vm525, %v518, %v522
  %v527 = vand.u32 2147483647, %v517
  %vm528 = vcmp.eq.f32.partialorder %v527, 8.507059e+37
  %v529 = vand.u32 %v517, 2147483648
  %v530 = vor.u32 1.1754944e-38, %v529
  %v531 = vsel %vm528, %v530, %v526
  %v532 = vmul.f32 1.0, %v531
  %v534 = vrot.slane %v471, 4
  %v536 = vadd.f32 %v534, %v497
  %v537 = vxor.u32 %v536, 2147483648
  %v538 = vmul.f32 %v537, 1.442695
  %v539 = vpow.pop %v538
  %v540 = vadd.f32 %v539, 1.0
  %v541 = vrcp.pop %v540
  %v542 = vmul.f32 %v540, %v541
  %v543 = vsub.f32 1.0, %v542
  %v544 = vmul.f32 %v541, %v543
  %v545 = vadd.f32 %v541, %v544
  %vm546 = vweird.f32 %v540
  %vm547 = vweird.f32 %v541
  %vm548 = vmor %vm546, %vm547
  %v549 = vsel %vm548, %v541, %v545
  %v550 = vand.u32 2147483647, %v540
  %vm551 = vcmp.eq.f32.partialorder %v550, 8.507059e+37
  %v552 = vand.u32 %v540, 2147483648
  %v553 = vor.u32 1.1754944e-38, %v552
  %v554 = vsel %vm551, %v553, %v549
  %v555 = vmul.f32 1.0, %v554
  %v556 = vadd.f32 %v510, %v63
  %v557 = vmul.f32 %v532, %v556
  %v558 = vadd.f32 %v472, %v557
  %v559 = vtanh.pop %v558
  %v560 = vsub.f32 %v469, %v559
  %v561 = vmul.f32 %v555, %v560
  %v562 = vadd.f32 %v559, %v561
  %s563 = scalar_lea.vmem %s0, 48
  %v564 = vld [vmem:[%s563] sm:$0xff]
  %v565 = vld [vmem:[%s563 + $0x8] sm:$0xf]
  %v566 = vpack.c.bf16 %v562, %v562
  %567 = vmatpush.bf16.msra.mxu0 %v168
  %568 = vmatpush.bf16.msra.mxu0 %v165
  %569 = vmatpush.bf16.msra.mxu0 %v162
  %570 = vmatpush.bf16.msra.mxu0 %v159
  %571 = vmatpush.bf16.msra.mxu0 %v156
  %572 = vmatpush.bf16.msra.mxu0 %v153
  %573 = vmatpush.bf16.msra.mxu0 %v150
  %574 = vmatpush.bf16.msra.mxu0 %v147
  %575 = vmatmul.bf16.gmra.mxu0 %v566
  %v576 = vpop.f32.mrf.mxu0
  %v577 = vadd.f32 0.0, %v576
  %v578 = vpop.f32.mrf.mxu0
  %579 = vdwg.mxu0
  %580 = vmatpush.bf16.msra.mxu0 %v169
  %581 = vmatpush.bf16.msra.mxu0 %v166
  %582 = vmatpush.bf16.msra.mxu0 %v163
  %583 = vmatpush.bf16.msra.mxu0 %v160
  %584 = vmatpush.bf16.msra.mxu0 %v157
  %585 = vmatpush.bf16.msra.mxu0 %v154
  %586 = vmatpush.bf16.msra.mxu0 %v151
  %587 = vmatpush.bf16.msra.mxu0 %v148
  %588 = vmatmul.bf16.gmra.mxu0 %v566
  %v589 = vpop.f32.mrf.mxu0
  %v590 = vadd.f32 0.0, %v589
  %v591 = vpop.f32.mrf.mxu0
  %592 = vdwg.mxu0
  %593 = vmatpush.bf16.msra.mxu0 %v170
  %594 = vmatpush.bf16.msra.mxu0 %v167
  %595 = vmatpush.bf16.msra.mxu0 %v164
  %596 = vmatpush.bf16.msra.mxu0 %v161
  %597 = vmatpush.bf16.msra.mxu0 %v158
  %598 = vmatpush.bf16.msra.mxu0 %v155
  %599 = vmatpush.bf16.msra.mxu0 %v152
  %600 = vmatpush.bf16.msra.mxu0 %v149
  %601 = vmatmul.bf16.gmra.mxu0 %v566
  %v602 = vpop.f32.mrf.mxu0
  %v603 = vadd.f32 0.0, %v602
  %v604 = vpop.f32.mrf.mxu0
  %605 = vdwg.mxu0
  %v606 = vadd.f32 %v564, %v577
  %v607 = vxor.u32 %v606, 2147483648
  %v608 = vmul.f32 %v607, 1.442695
  %v609 = vpow.pop %v608
  %v610 = vadd.f32 %v609, 1.0
  %v611 = vrcp.pop %v610
  %v612 = vmul.f32 %v610, %v611
  %v613 = vsub.f32 1.0, %v612
  %v614 = vmul.f32 %v611, %v613
  %v615 = vadd.f32 %v611, %v614
  %vm616 = vweird.f32 %v610
  %vm617 = vweird.f32 %v611
  %vm618 = vmor %vm616, %vm617
  %v619 = vsel %vm618, %v611, %v615
  %v620 = vand.u32 2147483647, %v610
  %vm621 = vcmp.eq.f32.partialorder %v620, 8.507059e+37
  %v622 = vand.u32 %v610, 2147483648
  %v623 = vor.u32 1.1754944e-38, %v622
  %v624 = vsel %vm621, %v623, %v619
  %v625 = vmul.f32 1.0, %v624
  %v627 = vrot.slane %v564, 4
  %v629 = vadd.f32 %v627, %v590
  %v630 = vxor.u32 %v629, 2147483648
  %v631 = vmul.f32 %v630, 1.442695
  %v632 = vpow.pop %v631
  %v633 = vadd.f32 %v632, 1.0
  %v634 = vrcp.pop %v633
  %v635 = vmul.f32 %v633, %v634
  %v636 = vsub.f32 1.0, %v635
  %v637 = vmul.f32 %v634, %v636
  %v638 = vadd.f32 %v634, %v637
  %vm639 = vweird.f32 %v633
  %vm640 = vweird.f32 %v634
  %vm641 = vmor %vm639, %vm640
  %v642 = vsel %vm641, %v634, %v638
  %v643 = vand.u32 2147483647, %v633
  %vm644 = vcmp.eq.f32.partialorder %v643, 8.507059e+37
  %v645 = vand.u32 %v633, 2147483648
  %v646 = vor.u32 1.1754944e-38, %v645
  %v647 = vsel %vm644, %v646, %v642
  %v648 = vmul.f32 1.0, %v647
  %v649 = vadd.f32 %v603, %v63
  %v650 = vmul.f32 %v625, %v649
  %v651 = vadd.f32 %v565, %v650
  %v652 = vtanh.pop %v651
  %v653 = vsub.f32 %v562, %v652
  %v654 = vmul.f32 %v648, %v653
  %v655 = vadd.f32 %v652, %v654
  %s656 = scalar_lea.vmem %s0, 60
  %v657 = vld [vmem:[%s656] sm:$0xff]
  %v658 = vld [vmem:[%s656 + $0x8] sm:$0xf]
  %v659 = vpack.c.bf16 %v655, %v655
  %660 = vmatpush.bf16.msra.mxu0 %v168
  %661 = vmatpush.bf16.msra.mxu0 %v165
  %662 = vmatpush.bf16.msra.mxu0 %v162
  %663 = vmatpush.bf16.msra.mxu0 %v159
  %664 = vmatpush.bf16.msra.mxu0 %v156
  %665 = vmatpush.bf16.msra.mxu0 %v153
  %666 = vmatpush.bf16.msra.mxu0 %v150
  %667 = vmatpush.bf16.msra.mxu0 %v147
  %668 = vmatmul.bf16.gmra.mxu0 %v659
  %v669 = vpop.f32.mrf.mxu0
  %v670 = vadd.f32 0.0, %v669
  %v671 = vpop.f32.mrf.mxu0
  %672 = vdwg.mxu0
  %673 = vmatpush.bf16.msra.mxu0 %v169
  %674 = vmatpush.bf16.msra.mxu0 %v166
  %675 = vmatpush.bf16.msra.mxu0 %v163
  %676 = vmatpush.bf16.msra.mxu0 %v160
  %677 = vmatpush.bf16.msra.mxu0 %v157
  %678 = vmatpush.bf16.msra.mxu0 %v154
  %679 = vmatpush.bf16.msra.mxu0 %v151
  %680 = vmatpush.bf16.msra.mxu0 %v148
  %681 = vmatmul.bf16.gmra.mxu0 %v659
  %v682 = vpop.f32.mrf.mxu0
  %v683 = vadd.f32 0.0, %v682
  %v684 = vpop.f32.mrf.mxu0
  %685 = vdwg.mxu0
  %686 = vmatpush.bf16.msra.mxu0 %v170
  %687 = vmatpush.bf16.msra.mxu0 %v167
  %688 = vmatpush.bf16.msra.mxu0 %v164
  %689 = vmatpush.bf16.msra.mxu0 %v161
  %690 = vmatpush.bf16.msra.mxu0 %v158
  %691 = vmatpush.bf16.msra.mxu0 %v155
  %692 = vmatpush.bf16.msra.mxu0 %v152
  %693 = vmatpush.bf16.msra.mxu0 %v149
  %694 = vmatmul.bf16.gmra.mxu0 %v659
  %v695 = vpop.f32.mrf.mxu0
  %v696 = vadd.f32 0.0, %v695
  %v697 = vpop.f32.mrf.mxu0
  %698 = vdwg.mxu0
  %v699 = vadd.f32 %v657, %v670
  %v700 = vxor.u32 %v699, 2147483648
  %v701 = vmul.f32 %v700, 1.442695
  %v702 = vpow.pop %v701
  %v703 = vadd.f32 %v702, 1.0
  %v704 = vrcp.pop %v703
  %v705 = vmul.f32 %v703, %v704
  %v706 = vsub.f32 1.0, %v705
  %v707 = vmul.f32 %v704, %v706
  %v708 = vadd.f32 %v704, %v707
  %vm709 = vweird.f32 %v703
  %vm710 = vweird.f32 %v704
  %vm711 = vmor %vm709, %vm710
  %v712 = vsel %vm711, %v704, %v708
  %v713 = vand.u32 2147483647, %v703
  %vm714 = vcmp.eq.f32.partialorder %v713, 8.507059e+37
  %v715 = vand.u32 %v703, 2147483648
  %v716 = vor.u32 1.1754944e-38, %v715
  %v717 = vsel %vm714, %v716, %v712
  %v718 = vmul.f32 1.0, %v717
  %v720 = vrot.slane %v657, 4
  %v722 = vadd.f32 %v720, %v683
  %v723 = vxor.u32 %v722, 2147483648
  %v724 = vmul.f32 %v723, 1.442695
  %v725 = vpow.pop %v724
  %v726 = vadd.f32 %v725, 1.0
  %v727 = vrcp.pop %v726
  %v728 = vmul.f32 %v726, %v727
  %v729 = vsub.f32 1.0, %v728
  %v730 = vmul.f32 %v727, %v729
  %v731 = vadd.f32 %v727, %v730
  %vm732 = vweird.f32 %v726
  %vm733 = vweird.f32 %v727
  %vm734 = vmor %vm732, %vm733
  %v735 = vsel %vm734, %v727, %v731
  %v736 = vand.u32 2147483647, %v726
  %vm737 = vcmp.eq.f32.partialorder %v736, 8.507059e+37
  %v738 = vand.u32 %v726, 2147483648
  %v739 = vor.u32 1.1754944e-38, %v738
  %v740 = vsel %vm737, %v739, %v735
  %v741 = vmul.f32 1.0, %v740
  %v742 = vadd.f32 %v696, %v63
  %v743 = vmul.f32 %v718, %v742
  %v744 = vadd.f32 %v658, %v743
  %v745 = vtanh.pop %v744
  %v746 = vsub.f32 %v655, %v745
  %v747 = vmul.f32 %v741, %v746
  %v748 = vadd.f32 %v745, %v747
  %s749 = scalar_lea.vmem %s0, 72
  %v750 = vld [vmem:[%s749] sm:$0xff]
  %v751 = vld [vmem:[%s749 + $0x8] sm:$0xf]
  %v752 = vpack.c.bf16 %v748, %v748
  %753 = vmatpush.bf16.msra.mxu0 %v168
  %754 = vmatpush.bf16.msra.mxu0 %v165
  %755 = vmatpush.bf16.msra.mxu0 %v162
  %756 = vmatpush.bf16.msra.mxu0 %v159
  %757 = vmatpush.bf16.msra.mxu0 %v156
  %758 = vmatpush.bf16.msra.mxu0 %v153
  %759 = vmatpush.bf16.msra.mxu0 %v150
  %760 = vmatpush.bf16.msra.mxu0 %v147
  %761 = vmatmul.bf16.gmra.mxu0 %v752
  %v762 = vpop.f32.mrf.mxu0
  %v763 = vadd.f32 0.0, %v762
  %v764 = vpop.f32.mrf.mxu0
  %765 = vdwg.mxu0
  %766 = vmatpush.bf16.msra.mxu0 %v169
  %767 = vmatpush.bf16.msra.mxu0 %v166
  %768 = vmatpush.bf16.msra.mxu0 %v163
  %769 = vmatpush.bf16.msra.mxu0 %v160
  %770 = vmatpush.bf16.msra.mxu0 %v157
  %771 = vmatpush.bf16.msra.mxu0 %v154
  %772 = vmatpush.bf16.msra.mxu0 %v151
  %773 = vmatpush.bf16.msra.mxu0 %v148
  %774 = vmatmul.bf16.gmra.mxu0 %v752
  %v775 = vpop.f32.mrf.mxu0
  %v776 = vadd.f32 0.0, %v775
  %v777 = vpop.f32.mrf.mxu0
  %778 = vdwg.mxu0
  %779 = vmatpush.bf16.msra.mxu0 %v170
  %780 = vmatpush.bf16.msra.mxu0 %v167
  %781 = vmatpush.bf16.msra.mxu0 %v164
  %782 = vmatpush.bf16.msra.mxu0 %v161
  %783 = vmatpush.bf16.msra.mxu0 %v158
  %784 = vmatpush.bf16.msra.mxu0 %v155
  %785 = vmatpush.bf16.msra.mxu0 %v152
  %786 = vmatpush.bf16.msra.mxu0 %v149
  %787 = vmatmul.bf16.gmra.mxu0 %v752
  %v788 = vpop.f32.mrf.mxu0
  %v789 = vadd.f32 0.0, %v788
  %v790 = vpop.f32.mrf.mxu0
  %791 = vdwg.mxu0
  %v792 = vadd.f32 %v750, %v763
  %v793 = vxor.u32 %v792, 2147483648
  %v794 = vmul.f32 %v793, 1.442695
  %v795 = vpow.pop %v794
  %v796 = vadd.f32 %v795, 1.0
  %v797 = vrcp.pop %v796
  %v798 = vmul.f32 %v796, %v797
  %v799 = vsub.f32 1.0, %v798
  %v800 = vmul.f32 %v797, %v799
  %v801 = vadd.f32 %v797, %v800
  %vm802 = vweird.f32 %v796
  %vm803 = vweird.f32 %v797
  %vm804 = vmor %vm802, %vm803
  %v805 = vsel %vm804, %v797, %v801
  %v806 = vand.u32 2147483647, %v796
  %vm807 = vcmp.eq.f32.partialorder %v806, 8.507059e+37
  %v808 = vand.u32 %v796, 2147483648
  %v809 = vor.u32 1.1754944e-38, %v808
  %v810 = vsel %vm807, %v809, %v805
  %v811 = vmul.f32 1.0, %v810
  %v813 = vrot.slane %v750, 4
  %v815 = vadd.f32 %v813, %v776
  %v816 = vxor.u32 %v815, 2147483648
  %v817 = vmul.f32 %v816, 1.442695
  %v818 = vpow.pop %v817
  %v819 = vadd.f32 %v818, 1.0
  %v820 = vrcp.pop %v819
  %v821 = vmul.f32 %v819, %v820
  %v822 = vsub.f32 1.0, %v821
  %v823 = vmul.f32 %v820, %v822
  %v824 = vadd.f32 %v820, %v823
  %vm825 = vweird.f32 %v819
  %vm826 = vweird.f32 %v820
  %vm827 = vmor %vm825, %vm826
  %v828 = vsel %vm827, %v820, %v824
  %v829 = vand.u32 2147483647, %v819
  %vm830 = vcmp.eq.f32.partialorder %v829, 8.507059e+37
  %v831 = vand.u32 %v819, 2147483648
  %v832 = vor.u32 1.1754944e-38, %v831
  %v833 = vsel %vm830, %v832, %v828
  %v834 = vmul.f32 1.0, %v833
  %v835 = vadd.f32 %v789, %v63
  %v836 = vmul.f32 %v811, %v835
  %v837 = vadd.f32 %v751, %v836
  %v838 = vtanh.pop %v837
  %v839 = vsub.f32 %v748, %v838
  %v840 = vmul.f32 %v834, %v839
  %v841 = vadd.f32 %v838, %v840
  %s842 = scalar_lea.vmem %s0, 84
  %v843 = vld [vmem:[%s842] sm:$0xff]
  %v844 = vld [vmem:[%s842 + $0x8] sm:$0xf]
  %v845 = vpack.c.bf16 %v841, %v841
  %846 = vmatpush.bf16.msra.mxu0 %v168
  %847 = vmatpush.bf16.msra.mxu0 %v165
  %848 = vmatpush.bf16.msra.mxu0 %v162
  %849 = vmatpush.bf16.msra.mxu0 %v159
  %850 = vmatpush.bf16.msra.mxu0 %v156
  %851 = vmatpush.bf16.msra.mxu0 %v153
  %852 = vmatpush.bf16.msra.mxu0 %v150
  %853 = vmatpush.bf16.msra.mxu0 %v147
  %854 = vmatmul.bf16.gmra.mxu0 %v845
  %v855 = vpop.f32.mrf.mxu0
  %v856 = vadd.f32 0.0, %v855
  %v857 = vpop.f32.mrf.mxu0
  %858 = vdwg.mxu0
  %859 = vmatpush.bf16.msra.mxu0 %v169
  %860 = vmatpush.bf16.msra.mxu0 %v166
  %861 = vmatpush.bf16.msra.mxu0 %v163
  %862 = vmatpush.bf16.msra.mxu0 %v160
  %863 = vmatpush.bf16.msra.mxu0 %v157
  %864 = vmatpush.bf16.msra.mxu0 %v154
  %865 = vmatpush.bf16.msra.mxu0 %v151
  %866 = vmatpush.bf16.msra.mxu0 %v148
  %867 = vmatmul.bf16.gmra.mxu0 %v845
  %v868 = vpop.f32.mrf.mxu0
  %v869 = vadd.f32 0.0, %v868
  %v870 = vpop.f32.mrf.mxu0
  %871 = vdwg.mxu0
  %872 = vmatpush.bf16.msra.mxu0 %v170
  %873 = vmatpush.bf16.msra.mxu0 %v167
  %874 = vmatpush.bf16.msra.mxu0 %v164
  %875 = vmatpush.bf16.msra.mxu0 %v161
  %876 = vmatpush.bf16.msra.mxu0 %v158
  %877 = vmatpush.bf16.msra.mxu0 %v155
  %878 = vmatpush.bf16.msra.mxu0 %v152
  %879 = vmatpush.bf16.msra.mxu0 %v149
  %880 = vmatmul.bf16.gmra.mxu0 %v845
  %v881 = vpop.f32.mrf.mxu0
  %v882 = vadd.f32 0.0, %v881
  %v883 = vpop.f32.mrf.mxu0
  %884 = vdwg.mxu0
  %v885 = vadd.f32 %v843, %v856
  %v886 = vxor.u32 %v885, 2147483648
  %v887 = vmul.f32 %v886, 1.442695
  %v888 = vpow.pop %v887
  %v889 = vadd.f32 %v888, 1.0
  %v890 = vrcp.pop %v889
  %v891 = vmul.f32 %v889, %v890
  %v892 = vsub.f32 1.0, %v891
  %v893 = vmul.f32 %v890, %v892
  %v894 = vadd.f32 %v890, %v893
  %vm895 = vweird.f32 %v889
  %vm896 = vweird.f32 %v890
  %vm897 = vmor %vm895, %vm896
  %v898 = vsel %vm897, %v890, %v894
  %v899 = vand.u32 2147483647, %v889
  %vm900 = vcmp.eq.f32.partialorder %v899, 8.507059e+37
  %v901 = vand.u32 %v889, 2147483648
  %v902 = vor.u32 1.1754944e-38, %v901
  %v903 = vsel %vm900, %v902, %v898
  %v904 = vmul.f32 1.0, %v903
  %v906 = vrot.slane %v843, 4
  %v908 = vadd.f32 %v906, %v869
  %v909 = vxor.u32 %v908, 2147483648
  %v910 = vmul.f32 %v909, 1.442695
  %v911 = vpow.pop %v910
  %v912 = vadd.f32 %v911, 1.0
  %v913 = vrcp.pop %v912
  %v914 = vmul.f32 %v912, %v913
  %v915 = vsub.f32 1.0, %v914
  %v916 = vmul.f32 %v913, %v915
  %v917 = vadd.f32 %v913, %v916
  %vm918 = vweird.f32 %v912
  %vm919 = vweird.f32 %v913
  %vm920 = vmor %vm918, %vm919
  %v921 = vsel %vm920, %v913, %v917
  %v922 = vand.u32 2147483647, %v912
  %vm923 = vcmp.eq.f32.partialorder %v922, 8.507059e+37
  %v924 = vand.u32 %v912, 2147483648
  %v925 = vor.u32 1.1754944e-38, %v924
  %v926 = vsel %vm923, %v925, %v921
  %v927 = vmul.f32 1.0, %v926
  %v928 = vadd.f32 %v882, %v63
  %v929 = vmul.f32 %v904, %v928
  %v930 = vadd.f32 %v844, %v929
  %v931 = vtanh.pop %v930
  %v932 = vsub.f32 %v841, %v931
  %v933 = vmul.f32 %v927, %v932
  %v934 = vadd.f32 %v931, %v933
  %v936 = vrot.slane %v934, 6
  %v937 = vrot.slane %v936, 4
  %v939 = vsub.f32 %v934, %v937
  %v940 = vand.u32 2147483647, %v939
  %v941 = vld [vmem:[%s3] sm:$0xff]
  %v942 = vld [vmem:[%s3 + $0x8] sm:$0xff]
  %v943 = vld [vmem:[%s3 + $0x10] sm:$0xff]
  %v944 = vld [vmem:[%s3 + $0x18] sm:$0xff]
  %v945 = vld [vmem:[%s3 + $0x20] sm:$0xff]
  %v946 = vld [vmem:[%s3 + $0x28] sm:$0xff]
  %v947 = vld [vmem:[%s3 + $0x30] sm:$0xff]
  %v948 = vld [vmem:[%s3 + $0x38] sm:$0xff]
  %v949 = vld [vmem:[%s3 + $0x40] sm:$0xff]
  %v950 = vld [vmem:[%s3 + $0x48] sm:$0xff]
  %v951 = vld [vmem:[%s3 + $0x50] sm:$0xff]
  %v952 = vld [vmem:[%s3 + $0x58] sm:$0xff]
  %v953 = vld [vmem:[%s3 + $0x60] sm:$0xff]
  %v954 = vld [vmem:[%s3 + $0x68] sm:$0xff]
  %v955 = vld [vmem:[%s3 + $0x70] sm:$0xff]
  %v956 = vld [vmem:[%s3 + $0x78] sm:$0xff]
  %v957 = vld [vmem:[%s4] sm:$0x1]
  %v959 = vperm.slane %v957, 0
  %961 = vmatpush.msra.mxu0 %v956
  %962 = vmatpush.msra.mxu0 %v955
  %963 = vmatpush.msra.mxu0 %v954
  %964 = vmatpush.msra.mxu0 %v953
  %965 = vmatpush.msra.mxu0 %v952
  %966 = vmatpush.msra.mxu0 %v951
  %967 = vmatpush.msra.mxu0 %v950
  %968 = vmatpush.msra.mxu0 %v949
  %969 = vmatpush.msra.mxu0 %v948
  %970 = vmatpush.msra.mxu0 %v947
  %971 = vmatpush.msra.mxu0 %v946
  %972 = vmatpush.msra.mxu0 %v945
  %973 = vmatpush.msra.mxu0 %v944
  %974 = vmatpush.msra.mxu0 %v943
  %975 = vmatpush.msra.mxu0 %v942
  %976 = vmatpush.msra.mxu0 %v941
  %977 = vmatmul.f32.gmra.mxu0 %v940
  %v978 = vpop.f32.mrf.mxu0
  %v979 = vadd.f32 %v959, %v978
  %980 = vdwg.mxu0
  %v981 = vmax.f32 %v979, 0.0
  %v982 = vld [vmem:[%s5] sm:$0x1]
  %v984 = vperm.slane %v982, 0
  %v986 = vmul.f32 %v981, %v984
  %vm987 = vcmask 254976
  %v988 = vsel %vm987, %v986, 0.0
  %989 = vadd.xlane.f32.xlu0 %v988
  %v990 = vpop.xlane.xlu0 %989
  %v991 = vld [vmem:[#allocation2] sm:$0x1]
  %v993 = vperm.slane %v991, 0
  %v995 = vadd.f32 %v990, %v993
  %v996 = vxor.u32 %v995, 2147483648
  %v997 = vmul.f32 %v996, 1.442695
  %v998 = vpow.pop %v997
  %v999 = vadd.f32 %v998, 1.0
  %v1000 = vrcp.pop %v999
  %v1001 = vmul.f32 %v999, %v1000
  %v1002 = vsub.f32 1.0, %v1001
  %v1003 = vmul.f32 %v1000, %v1002
  %v1004 = vadd.f32 %v1000, %v1003
  %vm1005 = vweird.f32 %v999
  %vm1006 = vweird.f32 %v1000
  %vm1007 = vmor %vm1005, %vm1006
  %v1008 = vsel %vm1007, %v1000, %v1004
  %v1009 = vand.u32 2147483647, %v999
  %vm1010 = vcmp.eq.f32.partialorder %v1009, 8.507059e+37
  %v1011 = vand.u32 %v999, 2147483648
  %v1012 = vor.u32 1.1754944e-38, %v1011
  %v1013 = vsel %vm1010, %v1012, %v1008
  %v1014 = vmul.f32 1.0, %v1013
  %vm1015 = vcmask 1024
  %1016 = vst.msk [vmem:[%s7] sm:$0x3] %vm1015, %v1014
  // Predicated region
  $region30: #{keypress_gru_forward.1} parent=0 // pred_check
    _
  $region31: #{keypress_gru_forward.1} parent=0 // pred_check_branch
    %1018 = sbr.rel (0) target = $region33
  $region32: #{keypress_gru_forward.1} parent=0 // pred_region
    _
  $region33: #{keypress_gru_forward.1} parent=0 // pred_fallthru
    _
  // Predicated region
  $region34: #{keypress_gru_forward.1} parent=0 // pred_check
    _
  $region35: #{keypress_gru_forward.1} parent=0 // pred_check_branch
    %1020 = sbr.rel (0) target = $region37
  $region36: #{keypress_gru_forward.1} parent=0 // pred_region
    _
  $region37: #{keypress_gru_forward.1} parent=0 // pred_fallthru
    _

</llo_original>
